<compile_context>
chip_gen: v7x
topology: tpu7x:2x2x1
jax: 0.10.0
libtpu: 0.0.40
codegen_flags: <defaults>
</compile_context>

<pallas_src>
import math

import jax
import jax.numpy as jnp
from jax.experimental import pallas as pl
from jax.experimental.pallas import tpu as pltpu

H1 = 256   # l1 width
H2 = 128   # l2 width


def _round_up(n, m):
    return ((n + m - 1) // m) * m


def _vmem_tile_bytes(shape, dtype):
    """VMEM footprint of one buffer: last dim padded to 128 lanes,
    second-to-last padded to 8 sublanes."""
    shape = tuple(int(d) for d in shape)
    if len(shape) == 1:
        shape = (1,) + shape
    lead = shape[:-2]
    sub = _round_up(shape[-2], 8)
    lane = _round_up(shape[-1], 128)
    n = 1
    for d in lead:
        n *= d
    return n * sub * lane * jnp.dtype(dtype).itemsize


def critic_kernel(x_ref, u_ref,
                  w1x_ref, w1u_ref, b1_ref,
                  w2_ref, b2_ref,
                  w3_ref, b3_ref,
                  q_ref):
    # l1 + relu:  relu(cat([x, u], 1) @ W1 + b1) as a split matmul.
    h1 = (jnp.dot(x_ref[...].astype(w1x_ref.dtype), w1x_ref[...],
                  preferred_element_type=jnp.float32)
          + jnp.dot(u_ref[...].astype(w1u_ref.dtype), w1u_ref[...],
                    preferred_element_type=jnp.float32)
          + b1_ref[...])
    h1 = jnp.maximum(h1, 0.0)

    # l2 + relu
    h2 = jnp.dot(h1.astype(w2_ref.dtype), w2_ref[...],
                 preferred_element_type=jnp.float32) + b2_ref[...]
    h2 = jnp.maximum(h2, 0.0)

    # l3 (scalar Q head): width-1 output computed as a lane reduction on the
    # XLU -> the stored slab is (block_b, 1), no lane padding / extra MXU pass.
    q = jnp.sum(h2 * w3_ref[...].astype(jnp.float32), axis=-1, keepdims=True)
    q_ref[...] = q + b3_ref[...]


def critic_forward(x, u, params, *, block_b=None):
    """x: (B, state_dim) f32; u: (B, action_dim) f32 -> (B, 1) f32."""
    B, S = x.shape
    A = u.shape[1]

    # Batch tile selection:
    #   * large batches: 512-row tiles (per-row scratch ~2 KB, far under VMEM)
    #     to amortize the ~600-cycle per-grid-step overhead;
    #   * mid-size batches: split into 2 tiles so the "parallel" batch axis
    #     can shard across both v7x TensorCores;
    #   * tiny batches: pad up to a sublane multiple.
    if block_b is None:
        if B >= 1024:
            block_b = 512
        elif B >= 16:
            block_b = _round_up(pl.cdiv(B, 2), 8)
        else:
            block_b = _round_up(max(B, 1), 8)
    block_b = max(8, _round_up(block_b, 8))

    Bp = _round_up(B, block_b)
    if Bp != B:
        x = jnp.pad(x, ((0, Bp - B), (0, 0)))
        u = jnp.pad(u, ((0, Bp - B), (0, 0)))

    w1x, w1u, b1 = params["w1x"], params["w1u"], params["b1"]
    w2, b2 = params["w2"], params["b2"]
    w3, b3 = params["w3"], params["b3"]      # w3: (1, H2) row, b3: (1, 1)

    grid = (Bp // block_b,)

    # Layout-aware VMEM budget: (8,128)-padded tiles, 2 buffers per pipelined
    # input/output (Pallas double-buffers even constant-index inputs),
    # plus the f32 intermediates, with 2x headroom. Cap at 48 MiB (v7x-safe).
    in_tiles = [
        ((block_b, S), x.dtype), ((block_b, A), u.dtype),
        (w1x.shape, w1x.dtype), (w1u.shape, w1u.dtype), (b1.shape, b1.dtype),
        (w2.shape, w2.dtype), (b2.shape, b2.dtype),
        (w3.shape, w3.dtype), (b3.shape, b3.dtype),
    ]
    out_tiles = [((block_b, 1), jnp.float32)]
    buf_bytes = 2 * sum(_vmem_tile_bytes(s, d) for s, d in in_tiles + out_tiles)
    inter_bytes = (_vmem_tile_bytes((block_b, H1), jnp.float32)
                   + _vmem_tile_bytes((block_b, H2), jnp.float32))
    vmem_limit = int(min(48 << 20, max(4 << 20, 2 * (buf_bytes + inter_bytes))))

    weight_bytes = sum(int(a.size) * a.dtype.itemsize
                       for a in (w1x, w1u, b1, w2, b2, w3, b3))
    flops = 2 * Bp * (S * H1 + A * H1 + H1 * H2 + H2)
    bytes_accessed = int(weight_bytes
                         + x.dtype.itemsize * Bp * S
                         + u.dtype.itemsize * Bp * A
                         + 4 * Bp)

    out = pl.pallas_call(
        critic_kernel,
        out_shape=jax.ShapeDtypeStruct((Bp, 1), jnp.float32),
        grid_spec=pltpu.PrefetchScalarGridSpec(
            num_scalar_prefetch=0,
            grid=grid,
            in_specs=[
                pl.BlockSpec((block_b, S), lambda i: (i, 0)),   # x tile
                pl.BlockSpec((block_b, A), lambda i: (i, 0)),   # u tile
                pl.BlockSpec((S, H1), lambda i: (0, 0)),        # weights:
                pl.BlockSpec((A, H1), lambda i: (0, 0)),        #   constant
                pl.BlockSpec((1, H1), lambda i: (0, 0)),        #   index ->
                pl.BlockSpec((H1, H2), lambda i: (0, 0)),       #   resident
                pl.BlockSpec((1, H2), lambda i: (0, 0)),        #   in VMEM
                pl.BlockSpec((1, H2), lambda i: (0, 0)),        # w3 row
                pl.BlockSpec((1, 1), lambda i: (0, 0)),         # b3 scalar
            ],
            out_specs=pl.BlockSpec((block_b, 1), lambda i: (i, 0)),
        ),
        compiler_params=pltpu.CompilerParams(
            dimension_semantics=("parallel",),
            vmem_limit_bytes=vmem_limit,
        ),
        cost_estimate=pl.CostEstimate(flops=flops, transcendentals=0,
                                      bytes_accessed=bytes_accessed),
    )(x, u, w1x, w1u, b1, w2, b2, w3, b3)

    # Output is already (Bp, 1): only drop batch padding (no-op when Bp == B).
    return out if Bp == B else out[:B]


def _init_linear(key, fan_in, fan_out):
    """PyTorch nn.Linear default init: U(-1/sqrt(fan_in), 1/sqrt(fan_in)).

    Weight returned in (in, out) layout; bias as (1, out).
    """
    kw, kb = jax.random.split(key)
    bound = 1.0 / math.sqrt(fan_in)
    w = jax.random.uniform(kw, (fan_in, fan_out), jnp.float32, -bound, bound)
    b = jax.random.uniform(kb, (1, fan_out), jnp.float32, -bound, bound)
    return w, b


def make_critic_params(key, state_dim, action_dim, dtype=jnp.float32):
    """dtype: matmul-input dtype for the weights (bf16 on v6e/v7x if desired;
    f32 default matches the PyTorch reference exactly)."""
    k1, k2, k3 = jax.random.split(key, 3)
    w1, b1 = _init_linear(k1, state_dim + action_dim, H1)
    w2, b2 = _init_linear(k2, H1, H2)
    w3, b3 = _init_linear(k3, H2, 1)

    # Split l1 so cat([x, u]) never has to be materialized.
    w1x, w1u = w1[:state_dim], w1[state_dim:]

    cast = lambda a: a.astype(dtype)
    return dict(
        w1x=cast(w1x), w1u=cast(w1u), b1=b1,
        w2=cast(w2), b2=b2,
        # l3 weight as a (1, H2) row (used in a lane reduction), bias (1, 1).
        w3=cast(w3.reshape(1, H2)), b3=b3.reshape(1, 1),
        # Unsplit originals kept for the pure-JAX reference.
        _w1=w1, _b1=b1, _w2=w2, _b2=b2, _w3=w3, _b3=b3,
    )


def critic_reference(x, u, params):
    xu = jnp.concatenate([x, u], axis=1)
    h1 = jnp.maximum(xu @ params["_w1"] + params["_b1"], 0.0)
    h2 = jnp.maximum(h1 @ params["_w2"] + params["_b2"], 0.0)
    return h2 @ params["_w3"] + params["_b3"]


if __name__ == "__main__":
    state_dim = 8
    action_dim = 2
    batch = 4

    root = jax.random.PRNGKey(0)
    k_params, k_x, k_u = jax.random.split(root, 3)

    params = make_critic_params(k_params, state_dim, action_dim)
    x = jax.random.normal(k_x, (batch, state_dim), jnp.float32)
    u = jax.random.normal(k_u, (batch, action_dim), jnp.float32)

    q = critic_forward(x, u, params)
    jax.block_until_ready(q)

    assert q.shape == (batch, 1)
    q_ref = critic_reference(x, u, params)
    assert jnp.allclose(q, q_ref, atol=1e-4, rtol=1e-4), (q, q_ref)
    print("KERNEL_OK")
</pallas_src>

<mosaic_0001>
module attributes {stable_mosaic.version = 11 : i64} {
  func.func @critic_kernel(%arg0: i32, %arg1: memref<8x8xf32, #tpu.memory_space<vmem>>, %arg2: memref<8x2xf32, #tpu.memory_space<vmem>>, %arg3: memref<8x256xf32, #tpu.memory_space<vmem>>, %arg4: memref<2x256xf32, #tpu.memory_space<vmem>>, %arg5: memref<1x256xf32, #tpu.memory_space<vmem>>, %arg6: memref<256x128xf32, #tpu.memory_space<vmem>>, %arg7: memref<1x128xf32, #tpu.memory_space<vmem>>, %arg8: memref<1x128xf32, #tpu.memory_space<vmem>>, %arg9: memref<1x1xf32, #tpu.memory_space<vmem>>, %arg10: memref<8x1xf32, #tpu.memory_space<vmem>>) attributes {dimension_semantics = [#tpu.dimension_semantics<parallel>], iteration_bounds = array<i64: 1>, scalar_prefetch = 0 : i64, scratch_operands = 0 : i64, tpu.core_type = #tpu.core_type<tc>, window_params = [{transform_indices = @transform_0, window_bounds = array<i64: 8, 8>}, {transform_indices = @transform_1, window_bounds = array<i64: 8, 2>}, {pipeline_mode = #tpu.pipeline_mode<synchronous>, transform_indices = @transform_2, window_bounds = array<i64: 8, 256>}, {pipeline_mode = #tpu.pipeline_mode<synchronous>, transform_indices = @transform_3, window_bounds = array<i64: 2, 256>}, {pipeline_mode = #tpu.pipeline_mode<synchronous>, transform_indices = @transform_4, window_bounds = array<i64: 1, 256>}, {pipeline_mode = #tpu.pipeline_mode<synchronous>, transform_indices = @transform_5, window_bounds = array<i64: 256, 128>}, {pipeline_mode = #tpu.pipeline_mode<synchronous>, transform_indices = @transform_6, window_bounds = array<i64: 1, 128>}, {pipeline_mode = #tpu.pipeline_mode<synchronous>, transform_indices = @transform_7, window_bounds = array<i64: 1, 128>}, {pipeline_mode = #tpu.pipeline_mode<synchronous>, transform_indices = @transform_8, window_bounds = array<i64: 1, 1>}, {transform_indices = @transform_9, window_bounds = array<i64: 8, 1>}]} {
    %c0 = arith.constant 0 : index
    %c0_0 = arith.constant 0 : index
    %0 = vector.load %arg1[%c0, %c0_0] : memref<8x8xf32, #tpu.memory_space<vmem>>, vector<8x8xf32>
    %c0_1 = arith.constant 0 : index
    %c0_2 = arith.constant 0 : index
    %1 = vector.load %arg3[%c0_1, %c0_2] : memref<8x256xf32, #tpu.memory_space<vmem>>, vector<8x256xf32>
    %cst = arith.constant dense<0.000000e+00> : vector<8x256xf32>
    %2 = tpu.matmul %0, %1, %cst {dimension_numbers = #tpu.dot_dimension_numbers<[1], [0], [0], [1], [0, 0, 1, 1], [], []>} : vector<8x8xf32>, vector<8x256xf32>, vector<8x256xf32> -> vector<8x256xf32>
    %c0_3 = arith.constant 0 : index
    %c0_4 = arith.constant 0 : index
    %3 = vector.load %arg2[%c0_3, %c0_4] : memref<8x2xf32, #tpu.memory_space<vmem>>, vector<8x2xf32>
    %c0_5 = arith.constant 0 : index
    %c0_6 = arith.constant 0 : index
    %4 = vector.load %arg4[%c0_5, %c0_6] : memref<2x256xf32, #tpu.memory_space<vmem>>, vector<2x256xf32>
    %cst_7 = arith.constant dense<0.000000e+00> : vector<8x256xf32>
    %5 = tpu.matmul %3, %4, %cst_7 {dimension_numbers = #tpu.dot_dimension_numbers<[1], [0], [0], [1], [0, 0, 1, 1], [], []>} : vector<8x2xf32>, vector<2x256xf32>, vector<8x256xf32> -> vector<8x256xf32>
    %6 = arith.addf %2, %5 : vector<8x256xf32>
    %c0_8 = arith.constant 0 : index
    %c0_9 = arith.constant 0 : index
    %7 = vector.load %arg5[%c0_8, %c0_9] : memref<1x256xf32, #tpu.memory_space<vmem>>, vector<1x256xf32>
    %8 = vector.broadcast %7 : vector<1x256xf32> to vector<8x256xf32>
    %9 = arith.addf %6, %8 : vector<8x256xf32>
    %cst_10 = arith.constant 0.000000e+00 : f32
    %10 = vector.broadcast %cst_10 : f32 to vector<8x256xf32>
    %11 = arith.maximumf %9, %10 : vector<8x256xf32>
    %c0_11 = arith.constant 0 : index
    %c0_12 = arith.constant 0 : index
    %12 = vector.load %arg6[%c0_11, %c0_12] : memref<256x128xf32, #tpu.memory_space<vmem>>, vector<256x128xf32>
    %cst_13 = arith.constant dense<0.000000e+00> : vector<8x128xf32>
    %13 = tpu.matmul %11, %12, %cst_13 {dimension_numbers = #tpu.dot_dimension_numbers<[1], [0], [0], [1], [0, 0, 1, 1], [], []>} : vector<8x256xf32>, vector<256x128xf32>, vector<8x128xf32> -> vector<8x128xf32>
    %c0_14 = arith.constant 0 : index
    %c0_15 = arith.constant 0 : index
    %14 = vector.load %arg7[%c0_14, %c0_15] : memref<1x128xf32, #tpu.memory_space<vmem>>, vector<1x128xf32>
    %15 = vector.broadcast %14 : vector<1x128xf32> to vector<8x128xf32>
    %16 = arith.addf %13, %15 : vector<8x128xf32>
    %cst_16 = arith.constant 0.000000e+00 : f32
    %17 = vector.broadcast %cst_16 : f32 to vector<8x128xf32>
    %18 = arith.maximumf %16, %17 : vector<8x128xf32>
    %c0_17 = arith.constant 0 : index
    %c0_18 = arith.constant 0 : index
    %19 = vector.load %arg8[%c0_17, %c0_18] : memref<1x128xf32, #tpu.memory_space<vmem>>, vector<1x128xf32>
    %20 = vector.broadcast %19 : vector<1x128xf32> to vector<8x128xf32>
    %21 = arith.mulf %18, %20 : vector<8x128xf32>
    %cst_19 = arith.constant dense<0.000000e+00> : vector<8xf32>
    %22 = vector.multi_reduction <add>, %21, %cst_19 [1] : vector<8x128xf32> to vector<8xf32>
    %23 = vector.shape_cast %22 : vector<8xf32> to vector<8x1xf32>
    %c0_20 = arith.constant 0 : index
    %c0_21 = arith.constant 0 : index
    %24 = vector.load %arg9[%c0_20, %c0_21] : memref<1x1xf32, #tpu.memory_space<vmem>>, vector<1x1xf32>
    %25 = vector.broadcast %24 : vector<1x1xf32> to vector<8x1xf32>
    %26 = arith.addf %23, %25 : vector<8x1xf32>
    %c0_22 = arith.constant 0 : index
    %c0_23 = arith.constant 0 : index
    %27 = vector.load %arg10[%c0_22, %c0_23] : memref<8x1xf32, #tpu.memory_space<vmem>>, vector<8x1xf32>
    tpu.vector_store %arg10[%c0_22, %c0_23], %26 {strides = array<i32>} : memref<8x1xf32, #tpu.memory_space<vmem>>, vector<8x1xf32>,
    return
  }
  func.func @transform_0(%arg0: i32) -> (i32, i32) {
    %c0_i32 = arith.constant 0 : i32
    %c0_i32_0 = arith.constant 0 : i32
    return %arg0, %c0_i32 : i32, i32
  }
  func.func @transform_1(%arg0: i32) -> (i32, i32) {
    %c0_i32 = arith.constant 0 : i32
    %c0_i32_0 = arith.constant 0 : i32
    return %arg0, %c0_i32 : i32, i32
  }
  func.func @transform_2(%arg0: i32) -> (i32, i32) {
    %c0_i32 = arith.constant 0 : i32
    %c0_i32_0 = arith.constant 0 : i32
    %c0_i32_1 = arith.constant 0 : i32
    return %c0_i32, %c0_i32_0 : i32, i32
  }
  func.func @transform_3(%arg0: i32) -> (i32, i32) {
    %c0_i32 = arith.constant 0 : i32
    %c0_i32_0 = arith.constant 0 : i32
    %c0_i32_1 = arith.constant 0 : i32
    return %c0_i32, %c0_i32_0 : i32, i32
  }
  func.func @transform_4(%arg0: i32) -> (i32, i32) {
    %c0_i32 = arith.constant 0 : i32
    %c0_i32_0 = arith.constant 0 : i32
    %c0_i32_1 = arith.constant 0 : i32
    return %c0_i32, %c0_i32_0 : i32, i32
  }
  func.func @transform_5(%arg0: i32) -> (i32, i32) {
    %c0_i32 = arith.constant 0 : i32
    %c0_i32_0 = arith.constant 0 : i32
    %c0_i32_1 = arith.constant 0 : i32
    return %c0_i32, %c0_i32_0 : i32, i32
  }
  func.func @transform_6(%arg0: i32) -> (i32, i32) {
    %c0_i32 = arith.constant 0 : i32
    %c0_i32_0 = arith.constant 0 : i32
    %c0_i32_1 = arith.constant 0 : i32
    return %c0_i32, %c0_i32_0 : i32, i32
  }
  func.func @transform_7(%arg0: i32) -> (i32, i32) {
    %c0_i32 = arith.constant 0 : i32
    %c0_i32_0 = arith.constant 0 : i32
    %c0_i32_1 = arith.constant 0 : i32
    return %c0_i32, %c0_i32_0 : i32, i32
  }
  func.func @transform_8(%arg0: i32) -> (i32, i32) {
    %c0_i32 = arith.constant 0 : i32
    %c0_i32_0 = arith.constant 0 : i32
    %c0_i32_1 = arith.constant 0 : i32
    return %c0_i32, %c0_i32_0 : i32, i32
  }
  func.func @transform_9(%arg0: i32) -> (i32, i32) {
    %c0_i32 = arith.constant 0 : i32
    %c0_i32_0 = arith.constant 0 : i32
    return %arg0, %c0_i32 : i32, i32
  }
}

</mosaic_0001>

<llo_original>
// kernel: tpu_custom_call.1
$region0: #{tpu_custom_call.1}
  #allocation0 [shape = 'u32[]', space=smem, size = 0x4, offset = 0x4, fixed_abs, tag = 'smem constant byte address 0x4 - core index']
  #allocation1 [shape = 'u32[144,128]{1,0:T(1,128)}', space=vmem, size = 0x12000, scoped, tag = 'internal scratch']
  #allocation2 [shape = 'f32[1,1]{1,0:T(1,128)S(1)}', space=vmem, size = 0x200, scoped, tag = 'scoped memory for tpu_custom_call.1']
  %s0 = inlined_call_operand.hbm [shape: f32[8,8], index: 0, kind: input, shape index: {}]
  %s1 = inlined_call_operand.vmem [shape: f32[8,2], index: 1, kind: input, shape index: {}]
  %s2 = inlined_call_operand.vmem [shape: f32[8,256], index: 2, kind: input, shape index: {}]
  %s3 = inlined_call_operand.vmem [shape: f32[2,256], index: 3, kind: input, shape index: {}]
  %s4 = inlined_call_operand.vmem [shape: f32[1,256], index: 4, kind: input, shape index: {}]
  %s5 = inlined_call_operand.hbm [shape: f32[256,128], index: 5, kind: input, shape index: {}]
  %s6 = inlined_call_operand.vmem [shape: f32[1,128], index: 6, kind: input, shape index: {}]
  %s7 = inlined_call_operand.vmem [shape: f32[1,128], index: 7, kind: input, shape index: {}]
  %s8 = inlined_call_operand.<no memory space> [shape: f32[1,1], index: 8, kind: input, shape index: {}]
  %s9 = inlined_call_operand.vmem [shape: f32[8,1], index: 9, kind: output, shape index: {}]
  %s10 = sld [smem:[#allocation0]]
  $region54: #{tpu_custom_call.1} parent=0
    _
  %s12 = ssub.s32 1, %s10
  %s13 = scalar_select 0, %s12, %s10
  %v14 = vstv %s8
  %15 = vst [vmem:[#allocation2] sm:$0x1] %v14
  $region1: #{tpu_custom_call.1} parent=0
    #allocation3 [shape = 'u8[4096]{0}', space=vmem, size = 0x1000, scoped, tag = 'input window, operand 0, single buffered']
    #allocation4 [shape = 's32[1]{0}', space=sflag, size = 0x4, scoped, tag = 'scoped memory for tpu_custom_call.1']
    #allocation5 [shape = 'u8[131072]{0}', space=vmem, size = 0x20000, scoped, tag = 'input window, operand 5, single buffered']
    #allocation6 [shape = 's32[1]{0}', space=sflag, size = 0x4, scoped, tag = 'scoped memory for tpu_custom_call.1']
    %16 = vsyncpa [#allocation4], 0
    %17 = vsyncpa [#allocation6], 0
    // Predicated region
    $region2: #{tpu_custom_call.1} parent=1 // pred_check
      _
    $region3: #{tpu_custom_call.1} parent=1 // pred_check_branch
      %19 = sbr.rel (0) target = $region5
    $region4: #{tpu_custom_call.1} parent=1 // pred_region
      %s21 = ssub.s32 128, 128
      %22 = vsyncadd [#allocation4], %s21
      %s24 = sshll.u32 [#allocation3], 4
      %s25 = int_to_ptr.vmem [resolvable:$true] %s24
      %27 = dma.hbm_to_vmem [thread:$0]  %s0, 128, %s25, [#allocation4]
    $region5: #{tpu_custom_call.1} parent=1 // pred_fallthru
      _
    // Predicated region
    $region6: #{tpu_custom_call.1} parent=1 // pred_check
      _
    $region7: #{tpu_custom_call.1} parent=1 // pred_check_branch
      %29 = sbr.rel (0) target = $region9
    $region8: #{tpu_custom_call.1} parent=1 // pred_region
      _
    $region9: #{tpu_custom_call.1} parent=1 // pred_fallthru
      _
    // Predicated region
    $region10: #{tpu_custom_call.1} parent=1 // pred_check
      _
    $region11: #{tpu_custom_call.1} parent=1 // pred_check_branch
      %31 = sbr.rel (0) target = $region13
    $region12: #{tpu_custom_call.1} parent=1 // pred_region
      _
    $region13: #{tpu_custom_call.1} parent=1 // pred_fallthru
      _
    // Predicated region
    $region14: #{tpu_custom_call.1} parent=1 // pred_check
      _
    $region15: #{tpu_custom_call.1} parent=1 // pred_check_branch
      %33 = sbr.rel (0) target = $region17
    $region16: #{tpu_custom_call.1} parent=1 // pred_region
      _
    $region17: #{tpu_custom_call.1} parent=1 // pred_fallthru
      _
    // Predicated region
    $region18: #{tpu_custom_call.1} parent=1 // pred_check
      _
    $region19: #{tpu_custom_call.1} parent=1 // pred_check_branch
      %35 = sbr.rel (0) target = $region21
    $region20: #{tpu_custom_call.1} parent=1 // pred_region
      _
    $region21: #{tpu_custom_call.1} parent=1 // pred_fallthru
      _
    // Predicated region
    $region22: #{tpu_custom_call.1} parent=1 // pred_check
      _
    $region23: #{tpu_custom_call.1} parent=1 // pred_check_branch
      %37 = sbr.rel (0) target = $region25
    $region24: #{tpu_custom_call.1} parent=1 // pred_region
      %s39 = ssub.s32 4096, 4096
      %40 = vsyncadd [#allocation6], %s39
      %s41 = sshll.u32 [#allocation5], 4
      %s42 = int_to_ptr.vmem [resolvable:$true] %s41
      %47 = dma.hbm_to_vmem [thread:$0]  %s5, 4096, %s42, [#allocation6], 128, 128, 8
    $region25: #{tpu_custom_call.1} parent=1 // pred_fallthru
      _
    // Predicated region
    $region26: #{tpu_custom_call.1} parent=1 // pred_check
      _
    $region27: #{tpu_custom_call.1} parent=1 // pred_check_branch
      %49 = sbr.rel (0) target = $region29
    $region28: #{tpu_custom_call.1} parent=1 // pred_region
      _
    $region29: #{tpu_custom_call.1} parent=1 // pred_fallthru
      _
    // Predicated region
    $region30: #{tpu_custom_call.1} parent=1 // pred_check
      _
    $region31: #{tpu_custom_call.1} parent=1 // pred_check_branch
      %51 = sbr.rel (0) target = $region33
    $region32: #{tpu_custom_call.1} parent=1 // pred_region
      _
    $region33: #{tpu_custom_call.1} parent=1 // pred_fallthru
      _
    // Predicated region
    $region34: #{tpu_custom_call.1} parent=1 // pred_check
      _
    $region35: #{tpu_custom_call.1} parent=1 // pred_check_branch
      %53 = sbr.rel (0) target = $region37
    $region36: #{tpu_custom_call.1} parent=1 // pred_region
      _
    $region37: #{tpu_custom_call.1} parent=1 // pred_fallthru
      _
    // Predicated region
    $region38: #{tpu_custom_call.1} parent=1 // pred_check
      _
    $region39: #{tpu_custom_call.1} parent=1 // pred_check_branch
      %55 = sbr.rel (0) target = $region41
    $region40: #{tpu_custom_call.1} parent=1 // pred_region
      %56 = dma.done [#allocation4], 128
    $region41: #{tpu_custom_call.1} parent=1 // pred_fallthru
      _
    // Predicated region
    $region42: #{tpu_custom_call.1} parent=1 // pred_check
      _
    $region43: #{tpu_custom_call.1} parent=1 // pred_check_branch
      %58 = sbr.rel (0) target = $region45
    $region44: #{tpu_custom_call.1} parent=1 // pred_region
      %59 = dma.done [#allocation6], 4096
    $region45: #{tpu_custom_call.1} parent=1 // pred_fallthru
      _
    %v60 = vld [vmem:[#allocation3] sm:$0xff]
    %v61 = vld [vmem:[%s2] sm:$0xff]
    %v62 = vld [vmem:[%s2 + $0x8] sm:$0xff]
    %v63 = vld [vmem:[%s1] sm:$0xff]
    %v64 = vld [vmem:[%s3] sm:$0xf]
    %v67 = vunpack.c.l.s4 1983009808
    %v68 = vunpack.c.0.s8 %v67
    %v69 = vlaneseq
    %v70 = vshrl.u32 %v69, 7
    %v71 = vsub.s32 %v68, %v70
    %v72 = vrot.slane %v64, %v71
    %v73 = vcombine.high %v72, %v72
    %vm74 = vcmask 15360
    %v76 = vsel %vm74, %v63, 0
    %vm78 = vcmask 1041408
    %v79 = vsel %vm78, %v72, 0
    %v81 = vsel %vm78, %v73, 0
    %83 = vmatprep.subr.mxu0 %v81
    %84 = vmatpush1.msra.mxu0 %v79
    %85 = vmatprep.subr.mxu0 0.0
    %86 = vmatpush1.msra.mxu0 0.0
    %87 = vmatprep.subr.mxu0 0.0
    %88 = vmatpush1.msra.mxu0 0.0
    %89 = vmatprep.subr.mxu0 0.0
    %90 = vmatpush1.msra.mxu0 0.0
    %91 = vmatprep.subr.mxu0 0.0
    %92 = vmatpush1.msra.mxu0 0.0
    %93 = vmatprep.subr.mxu0 0.0
    %94 = vmatpush1.msra.mxu0 0.0
    %95 = vmatprep.subr.mxu0 0.0
    %96 = vmatpush1.msra.mxu0 0.0
    %97 = vmatprep.subr.mxu0 0.0
    %98 = vmatpush1.msra.mxu0 0.0
    %99 = vmatprep.subr.mxu0 0.0
    %100 = vmatpush1.msra.mxu0 0.0
    %101 = vmatprep.subr.mxu0 0.0
    %102 = vmatpush1.msra.mxu0 0.0
    %103 = vmatprep.subr.mxu0 0.0
    %104 = vmatpush1.msra.mxu0 0.0
    %105 = vmatprep.subr.mxu0 0.0
    %106 = vmatpush1.msra.mxu0 0.0
    %107 = vmatprep.subr.mxu0 0.0
    %108 = vmatpush1.msra.mxu0 0.0
    %109 = vmatprep.subr.mxu0 0.0
    %110 = vmatpush1.msra.mxu0 0.0
    %111 = vmatprep.subr.mxu0 0.0
    %112 = vmatpush1.msra.mxu0 0.0
    %113 = vmatprep.subr.mxu0 0.0
    %114 = vmatpush1.msra.mxu0 0.0
    %115 = vmatprep.subr.mxu0 0.0
    %116 = vmatpush1.msra.mxu0 0.0
    %117 = vmatprep.subr.mxu0 0.0
    %118 = vmatpush1.msra.mxu0 0.0
    %119 = vmatprep.subr.mxu0 0.0
    %120 = vmatpush1.msra.mxu0 0.0
    %121 = vmatprep.subr.mxu0 0.0
    %122 = vmatpush1.msra.mxu0 0.0
    %123 = vmatprep.subr.mxu0 0.0
    %124 = vmatpush1.msra.mxu0 0.0
    %125 = vmatprep.subr.mxu0 0.0
    %126 = vmatpush1.msra.mxu0 0.0
    %127 = vmatprep.subr.mxu0 0.0
    %128 = vmatpush1.msra.mxu0 0.0
    %129 = vmatprep.subr.mxu0 0.0
    %130 = vmatpush1.msra.mxu0 0.0
    %131 = vmatprep.subr.mxu0 0.0
    %132 = vmatpush1.msra.mxu0 0.0
    %133 = vmatprep.subr.mxu0 0.0
    %134 = vmatpush1.msra.mxu0 0.0
    %135 = vmatprep.subr.mxu0 0.0
    %136 = vmatpush1.msra.mxu0 0.0
    %137 = vmatprep.subr.mxu0 0.0
    %138 = vmatpush1.msra.mxu0 0.0
    %139 = vmatprep.subr.mxu0 0.0
    %140 = vmatpush1.msra.mxu0 0.0
    %141 = vmatprep.subr.mxu0 0.0
    %142 = vmatpush1.msra.mxu0 0.0
    %143 = vmatprep.subr.mxu0 0.0
    %144 = vmatpush1.msra.mxu0 0.0
    %145 = vmatprep.subr.mxu0 0.0
    %146 = vmatpush1.msra.mxu0 0.0
    %147 = vmatprep.mubr.f32.mxu0 0.0
    %148 = vmatmul.mubr.f32.gmra.mrb[0].mxu0 %v76
    %v149 = vpop.f32.mrb[0].mxu0
    %v150 = vadd.f32 0.0, %v149
    %v151 = vpop.f32.mrb[0].mxu0
    %v152 = vadd.f32 0.0, %v151
    %153 = vdwg.mxu0
    %vm154 = vcmask 64512
    %v156 = vsel %vm154, %v60, 0
    %158 = vmatprep.subr.mxu0 %v62
    %159 = vmatpush1.msra.mxu0 %v61
    %160 = vmatprep.subr.mxu0 0.0
    %161 = vmatpush1.msra.mxu0 0.0
    %162 = vmatprep.subr.mxu0 0.0
    %163 = vmatpush1.msra.mxu0 0.0
    %164 = vmatprep.subr.mxu0 0.0
    %165 = vmatpush1.msra.mxu0 0.0
    %166 = vmatprep.subr.mxu0 0.0
    %167 = vmatpush1.msra.mxu0 0.0
    %168 = vmatprep.subr.mxu0 0.0
    %169 = vmatpush1.msra.mxu0 0.0
    %170 = vmatprep.subr.mxu0 0.0
    %171 = vmatpush1.msra.mxu0 0.0
    %172 = vmatprep.subr.mxu0 0.0
    %173 = vmatpush1.msra.mxu0 0.0
    %174 = vmatprep.subr.mxu0 0.0
    %175 = vmatpush1.msra.mxu0 0.0
    %176 = vmatprep.subr.mxu0 0.0
    %177 = vmatpush1.msra.mxu0 0.0
    %178 = vmatprep.subr.mxu0 0.0
    %179 = vmatpush1.msra.mxu0 0.0
    %180 = vmatprep.subr.mxu0 0.0
    %181 = vmatpush1.msra.mxu0 0.0
    %182 = vmatprep.subr.mxu0 0.0
    %183 = vmatpush1.msra.mxu0 0.0
    %184 = vmatprep.subr.mxu0 0.0
    %185 = vmatpush1.msra.mxu0 0.0
    %186 = vmatprep.subr.mxu0 0.0
    %187 = vmatpush1.msra.mxu0 0.0
    %188 = vmatprep.subr.mxu0 0.0
    %189 = vmatpush1.msra.mxu0 0.0
    %190 = vmatprep.subr.mxu0 0.0
    %191 = vmatpush1.msra.mxu0 0.0
    %192 = vmatprep.subr.mxu0 0.0
    %193 = vmatpush1.msra.mxu0 0.0
    %194 = vmatprep.subr.mxu0 0.0
    %195 = vmatpush1.msra.mxu0 0.0
    %196 = vmatprep.subr.mxu0 0.0
    %197 = vmatpush1.msra.mxu0 0.0
    %198 = vmatprep.subr.mxu0 0.0
    %199 = vmatpush1.msra.mxu0 0.0
    %200 = vmatprep.subr.mxu0 0.0
    %201 = vmatpush1.msra.mxu0 0.0
    %202 = vmatprep.subr.mxu0 0.0
    %203 = vmatpush1.msra.mxu0 0.0
    %204 = vmatprep.subr.mxu0 0.0
    %205 = vmatpush1.msra.mxu0 0.0
    %206 = vmatprep.subr.mxu0 0.0
    %207 = vmatpush1.msra.mxu0 0.0
    %208 = vmatprep.subr.mxu0 0.0
    %209 = vmatpush1.msra.mxu0 0.0
    %210 = vmatprep.subr.mxu0 0.0
    %211 = vmatpush1.msra.mxu0 0.0
    %212 = vmatprep.subr.mxu0 0.0
    %213 = vmatpush1.msra.mxu0 0.0
    %214 = vmatprep.subr.mxu0 0.0
    %215 = vmatpush1.msra.mxu0 0.0
    %216 = vmatprep.subr.mxu0 0.0
    %217 = vmatpush1.msra.mxu0 0.0
    %218 = vmatprep.subr.mxu0 0.0
    %219 = vmatpush1.msra.mxu0 0.0
    %220 = vmatprep.subr.mxu0 0.0
    %221 = vmatpush1.msra.mxu0 0.0
    %222 = vmatprep.mubr.f32.mxu0 0.0
    %223 = vmatmul.mubr.f32.gmra.mrb[0].mxu0 %v156
    %v224 = vpop.f32.mrb[0].mxu0
    %v225 = vadd.f32 %v150, %v224
    %v226 = vpop.f32.mrb[0].mxu0
    %v227 = vadd.f32 %v152, %v226
    %228 = vdwg.mxu0
    %v229 = vld [vmem:[%s4] sm:$0x3]
    %v231 = vlaneseq
    %v232 = vshrl.u32 %v231, 7
    %v233 = vsub.s32 0, %v232
    %v234 = vrot.slane %v229, %v233
    %v235 = vlaneseq
    %v236 = vshrl.u32 %v235, 7
    %v237 = vsub.s32 1, %v236
    %v238 = vrot.slane %v229, %v237
    %v241 = vadd.f32 %v225, %v234
    %v242 = vadd.f32 %v227, %v238
    %v243 = vmax.f32 %v241, 0.0
    %v244 = vmax.f32 %v242, 0.0
    %v245 = vld [vmem:[#allocation5] sm:$0xff]
    %v246 = vld [vmem:[#allocation5 + $0x8] sm:$0xff]
    %v247 = vld [vmem:[#allocation5 + $0x10] sm:$0xff]
    %v248 = vld [vmem:[#allocation5 + $0x18] sm:$0xff]
    %v249 = vld [vmem:[#allocation5 + $0x20] sm:$0xff]
    %v250 = vld [vmem:[#allocation5 + $0x28] sm:$0xff]
    %v251 = vld [vmem:[#allocation5 + $0x30] sm:$0xff]
    %v252 = vld [vmem:[#allocation5 + $0x38] sm:$0xff]
    %v253 = vld [vmem:[#allocation5 + $0x40] sm:$0xff]
    %v254 = vld [vmem:[#allocation5 + $0x48] sm:$0xff]
    %v255 = vld [vmem:[#allocation5 + $0x50] sm:$0xff]
    %v256 = vld [vmem:[#allocation5 + $0x58] sm:$0xff]
    %v257 = vld [vmem:[#allocation5 + $0x60] sm:$0xff]
    %v258 = vld [vmem:[#allocation5 + $0x68] sm:$0xff]
    %v259 = vld [vmem:[#allocation5 + $0x70] sm:$0xff]
    %v260 = vld [vmem:[#allocation5 + $0x78] sm:$0xff]
    %v261 = vld [vmem:[#allocation5 + $0x80] sm:$0xff]
    %v262 = vld [vmem:[#allocation5 + $0x88] sm:$0xff]
    %v263 = vld [vmem:[#allocation5 + $0x90] sm:$0xff]
    %v264 = vld [vmem:[#allocation5 + $0x98] sm:$0xff]
    %v265 = vld [vmem:[#allocation5 + $0xa0] sm:$0xff]
    %v266 = vld [vmem:[#allocation5 + $0xa8] sm:$0xff]
    %v267 = vld [vmem:[#allocation5 + $0xb0] sm:$0xff]
    %v268 = vld [vmem:[#allocation5 + $0xb8] sm:$0xff]
    %v269 = vld [vmem:[#allocation5 + $0xc0] sm:$0xff]
    %v270 = vld [vmem:[#allocation5 + $0xc8] sm:$0xff]
    %v271 = vld [vmem:[#allocation5 + $0xd0] sm:$0xff]
    %v272 = vld [vmem:[#allocation5 + $0xd8] sm:$0xff]
    %v273 = vld [vmem:[#allocation5 + $0xe0] sm:$0xff]
    %v274 = vld [vmem:[#allocation5 + $0xe8] sm:$0xff]
    %v275 = vld [vmem:[#allocation5 + $0xf0] sm:$0xff]
    %v276 = vld [vmem:[#allocation5 + $0xf8] sm:$0xff]
    %v277 = vld [vmem:[%s6] sm:$0x1]
    %v279 = vlaneseq
    %v280 = vshrl.u32 %v279, 7
    %v281 = vsub.s32 0, %v280
    %v282 = vrot.slane %v277, %v281
    %284 = vmatprep.subr.mxu0 0.0
    %285 = vmatpush1.msra.mxu0 %v245
    %286 = vmatprep.subr.mxu0 0.0
    %287 = vmatpush1.msra.mxu0 %v246
    %288 = vmatprep.subr.mxu0 0.0
    %289 = vmatpush1.msra.mxu0 %v247
    %290 = vmatprep.subr.mxu0 0.0
    %291 = vmatpush1.msra.mxu0 %v248
    %292 = vmatprep.subr.mxu0 0.0
    %293 = vmatpush1.msra.mxu0 %v249
    %294 = vmatprep.subr.mxu0 0.0
    %295 = vmatpush1.msra.mxu0 %v250
    %296 = vmatprep.subr.mxu0 0.0
    %297 = vmatpush1.msra.mxu0 %v251
    %298 = vmatprep.subr.mxu0 0.0
    %299 = vmatpush1.msra.mxu0 %v252
    %300 = vmatprep.subr.mxu0 0.0
    %301 = vmatpush1.msra.mxu0 %v253
    %302 = vmatprep.subr.mxu0 0.0
    %303 = vmatpush1.msra.mxu0 %v254
    %304 = vmatprep.subr.mxu0 0.0
    %305 = vmatpush1.msra.mxu0 %v255
    %306 = vmatprep.subr.mxu0 0.0
    %307 = vmatpush1.msra.mxu0 %v256
    %308 = vmatprep.subr.mxu0 0.0
    %309 = vmatpush1.msra.mxu0 %v257
    %310 = vmatprep.subr.mxu0 0.0
    %311 = vmatpush1.msra.mxu0 %v258
    %312 = vmatprep.subr.mxu0 0.0
    %313 = vmatpush1.msra.mxu0 %v259
    %314 = vmatprep.subr.mxu0 0.0
    %315 = vmatpush1.msra.mxu0 %v260
    %316 = vmatprep.subr.mxu0 0.0
    %317 = vmatpush1.msra.mxu0 %v261
    %318 = vmatprep.subr.mxu0 0.0
    %319 = vmatpush1.msra.mxu0 %v262
    %320 = vmatprep.subr.mxu0 0.0
    %321 = vmatpush1.msra.mxu0 %v263
    %322 = vmatprep.subr.mxu0 0.0
    %323 = vmatpush1.msra.mxu0 %v264
    %324 = vmatprep.subr.mxu0 0.0
    %325 = vmatpush1.msra.mxu0 %v265
    %326 = vmatprep.subr.mxu0 0.0
    %327 = vmatpush1.msra.mxu0 %v266
    %328 = vmatprep.subr.mxu0 0.0
    %329 = vmatpush1.msra.mxu0 %v267
    %330 = vmatprep.subr.mxu0 0.0
    %331 = vmatpush1.msra.mxu0 %v268
    %332 = vmatprep.subr.mxu0 0.0
    %333 = vmatpush1.msra.mxu0 %v269
    %334 = vmatprep.subr.mxu0 0.0
    %335 = vmatpush1.msra.mxu0 %v270
    %336 = vmatprep.subr.mxu0 0.0
    %337 = vmatpush1.msra.mxu0 %v271
    %338 = vmatprep.subr.mxu0 0.0
    %339 = vmatpush1.msra.mxu0 %v272
    %340 = vmatprep.subr.mxu0 0.0
    %341 = vmatpush1.msra.mxu0 %v273
    %342 = vmatprep.subr.mxu0 0.0
    %343 = vmatpush1.msra.mxu0 %v274
    %344 = vmatprep.subr.mxu0 0.0
    %345 = vmatpush1.msra.mxu0 %v275
    %346 = vmatprep.subr.mxu0 0.0
    %347 = vmatpush1.msra.mxu0 %v276
    %348 = vmatprep.mubr.f32.mxu0 %v244
    %349 = vmatmul.mubr.f32.gmra.mrb[0].mxu0 %v243
    %v350 = vpop.f32.mrb[0].mxu0
    %v351 = vadd.f32 %v282, %v350
    %v352 = vpop.f32.mrb[0].mxu0
    %353 = vdwg.mxu0
    %v354 = vmax.f32 %v351, 0.0
    %v355 = vld [vmem:[%s7] sm:$0x1]
    %v357 = vlaneseq
    %v358 = vshrl.u32 %v357, 7
    %v359 = vsub.s32 0, %v358
    %v360 = vrot.slane %v355, %v359
    %v362 = vmul.f32 %v354, %v360
    %363 = vadd.xlane.f32.xlu0 %v362
    %v364 = vpop.xlane.xlu0 %363
    %v365 = vld [vmem:[#allocation2] sm:$0x1]
    %v367 = vlaneseq
    %v368 = vshrl.u32 %v367, 7
    %v369 = vsub.s32 0, %v368
    %v370 = vrot.slane %v365, %v369
    %v372 = vadd.f32 %v364, %v370
    %vm373 = vcmask 7168
    %374 = vst.msk [vmem:[%s9] sm:$0xff] %vm373, %v372
    // Predicated region
    $region46: #{tpu_custom_call.1} parent=1 // pred_check
      _
    $region47: #{tpu_custom_call.1} parent=1 // pred_check_branch
      %376 = sbr.rel (0) target = $region49
    $region48: #{tpu_custom_call.1} parent=1 // pred_region
      _
    $region49: #{tpu_custom_call.1} parent=1 // pred_fallthru
      _
    // Predicated region
    $region50: #{tpu_custom_call.1} parent=1 // pred_check
      _
    $region51: #{tpu_custom_call.1} parent=1 // pred_check_branch
      %378 = sbr.rel (0) target = $region53
    $region52: #{tpu_custom_call.1} parent=1 // pred_region
      _
    $region53: #{tpu_custom_call.1} parent=1 // pred_fallthru
      _
    %379 = vsyncpa [#allocation4], 1
    %380 = vsyncpa [#allocation6], 1

</llo_original>
